<compile_context>
chip_gen: v6e
topology: v6e:2x2x1
jax: 0.10.0
libtpu: 0.0.40
codegen_flags: <defaults>
</compile_context>

<pallas_src>
import functools

import jax
import jax.numpy as jnp
import numpy as np
from jax.experimental import pallas as pl
from jax.experimental.pallas import tpu as pltpu

# 48 MiB: safe on v7x (64 MiB physical per TC) and ample on v5e/v6e (128 MiB).
_VMEM_LIMIT = 48 * 1024 * 1024


# --------------------------------------------------------------------------------------
# Tile selection helpers
# --------------------------------------------------------------------------------------
def _round_up(x, m):
    return ((x + m - 1) // m) * m


def _pick_tm(M, row_channels, budget_bytes=12 << 20, cap=2048):
    """Row tile for flattened (M, C) matmul kernels.

    Sized so that all double-buffered (TM, C) blocks of one grid step fit in
    `budget_bytes` (f32, 2 buffers), capped at `cap` rows and rounded to the sublane
    multiple.  No forced split on tiny problems (grid is a serial loop on v5e/v6e).
    """
    tm = budget_bytes // (8 * max(int(row_channels), 1))   # 2 buffers * 4 bytes
    tm = max(8, min(tm, cap))
    tm = (tm // 8) * 8
    tm = min(tm, _round_up(M, 8))
    return tm


def _pick_th(H, cap=32):
    """Output-row tile (divides H) for the 3x3 halo kernel."""
    if H <= cap:
        return H
    th = cap
    while H % th:
        th -= 1
    if th < 8 and H <= 4 * cap:
        return H   # awkward H (e.g. prime): one fat tile beats many tiny ones
    # TODO(synk): support non-dividing TH with a masked tail tile instead of divisors.
    return th


def _fold_bn(conv_bias, bn, cout):
    """Fold conv bias + inference-mode BN into (scale, shift)."""
    if bn is None:
        return jnp.ones((cout,), jnp.float32), conv_bias
    gamma, beta, mean, var, eps = bn
    s = gamma * jax.lax.rsqrt(var + eps)
    return s, s * (conv_bias - mean) + beta


# --------------------------------------------------------------------------------------
# Pallas kernels
# --------------------------------------------------------------------------------------
def _conv1x1_bn_relu_kernel(x_ref, w_ref, s_ref, b_ref, o_ref):
    """conv1x1 + folded BN + ReLU on a (TM, Cin) row tile."""
    acc = jnp.dot(x_ref[...], w_ref[...], preferred_element_type=jnp.float32)
    o_ref[...] = jnp.maximum(acc * s_ref[...] + b_ref[...], 0.0).astype(o_ref.dtype)


def _conv1x1_bn_relu_res_kernel(h_ref, x_ref, w_ref, s_ref, b_ref,
                                wsc_ref, bsc_ref, o_ref):
    """Last conv1x1 + folded BN + ReLU, with the shortcut 1x1 conv (on the block
    input x) and the residual add fused into the same kernel."""
    main = jnp.dot(h_ref[...], w_ref[...], preferred_element_type=jnp.float32)
    main = jnp.maximum(main * s_ref[...] + b_ref[...], 0.0)
    sc = jnp.dot(x_ref[...], wsc_ref[...], preferred_element_type=jnp.float32)
    o_ref[...] = (main + sc + bsc_ref[...]).astype(o_ref.dtype)


def _conv3x3_halo_kernel(x_hbm, w_ref, s_ref, b_ref, o_ref, buf, sem,
                         *, TH, W, Cin, relu):
    """3x3 conv (stride 1, pad 1) + folded BN (+ReLU) on a halo'd row tile.

    x_hbm : (N, H, W, Cin) unpadded input, left in HBM (pl.ANY)
    w_ref : (9*Cin, Cout)  taps concatenated along K, dh-major / dw-minor
    buf   : (2, TH+2, W+2, Cin)  double-buffered VMEM halo tiles
    sem   : DMA semaphores, (2, 3) = (slot, {body, top-halo, bottom-halo})
    o_ref : (1, TH*W, Cout) lane-dense output slab
    """
    n = pl.program_id(0)
    t = pl.program_id(1)
    nT = pl.num_programs(1)

    def body_copy(tt, slot):
        return pltpu.make_async_copy(
            x_hbm.at[n, pl.ds(tt * TH, TH)],
            buf.at[slot, pl.ds(1, TH), pl.ds(1, W)],
            sem.at[slot, 0])

    def top_copy(tt, slot):
        return pltpu.make_async_copy(
            x_hbm.at[n, pl.ds(tt * TH - 1, 1)],
            buf.at[slot, pl.ds(0, 1), pl.ds(1, W)],
            sem.at[slot, 1])

    def bot_copy(tt, slot):
        return pltpu.make_async_copy(
            x_hbm.at[n, pl.ds(tt * TH + TH, 1)],
            buf.at[slot, pl.ds(TH + 1, 1), pl.ds(1, W)],
            sem.at[slot, 2])

    def issue(tt, slot):
        bslot = buf.at[slot]
        # Zero the halo frame.  The DMAs never touch columns 0 / W+1, and the
        # top/bottom rows are only zeroed at the image boundary (else they are DMA'd),
        # so all zero-stores are disjoint from the in-flight DMA writes.
        zcol = jnp.zeros((TH + 2, 1, Cin), jnp.float32)
        bslot[:, pl.ds(0, 1), :] = zcol
        bslot[:, pl.ds(W + 1, 1), :] = zcol

        body_copy(tt, slot).start()

        @pl.when(tt > 0)
        def _():
            top_copy(tt, slot).start()

        @pl.when(tt == 0)
        def _():
            bslot[pl.ds(0, 1), :, :] = jnp.zeros((1, W + 2, Cin), jnp.float32)

        @pl.when(tt < nT - 1)
        def _():
            bot_copy(tt, slot).start()

        @pl.when(tt == nT - 1)
        def _():
            bslot[pl.ds(TH + 1, 1), :, :] = jnp.zeros((1, W + 2, Cin), jnp.float32)

    slot = t % 2

    @pl.when(t == 0)
    def _():
        issue(t, slot)                 # prime the first row tile of this image

    @pl.when(t + 1 < nT)
    def _():
        issue(t + 1, 1 - slot)         # prefetch the next row tile (double buffer)

    # Wait for this tile's DMAs.
    body_copy(t, slot).wait()

    @pl.when(t > 0)
    def _():
        top_copy(t, slot).wait()

    @pl.when(t < nT - 1)
    def _():
        bot_copy(t, slot).wait()

    bv = buf[slot]                                            # (TH+2, W+2, Cin)

    # 3x3 as 9 accumulated channel-contraction matmuls.  Tap order (dh-major,
    # dw-minor, then Cin) matches w.reshape(9*Cin, Cout) from (3, 3, Cin, Cout).
    acc = None
    for dh in range(3):
        for dw in range(3):
            k = dh * 3 + dw
            tap = bv[dh:dh + TH, dw:dw + W, :].reshape(TH * W, Cin)
            part = jnp.dot(tap, w_ref[pl.ds(k * Cin, Cin), :],
                           preferred_element_type=jnp.float32)
            acc = part if acc is None else acc + part

    y = acc * s_ref[...] + b_ref[...]
    if relu:
        y = jnp.maximum(y, 0.0)
    o_ref[...] = y.reshape(o_ref.shape).astype(o_ref.dtype)


# --------------------------------------------------------------------------------------
# Kernel launchers (glue: reshapes / BN folding only)
# --------------------------------------------------------------------------------------
def conv1x1_bn_relu(x_nhwc, w, bias, bn):
    """1x1 conv + BN + ReLU.  w: (Cin, Cout)."""
    N, H, W, Cin = x_nhwc.shape
    Cout = w.shape[-1]
    scale, shift = _fold_bn(bias, bn, Cout)

    M = N * H * W
    TM = _pick_tm(M, Cin + Cout)
    Mpad = _round_up(M, TM)
    xr = x_nhwc.reshape(M, Cin)
    if Mpad != M:
        xr = jnp.pad(xr, ((0, Mpad - M), (0, 0)))

    out = pl.pallas_call(
        _conv1x1_bn_relu_kernel,
        out_shape=jax.ShapeDtypeStruct((Mpad, Cout), jnp.float32),
        grid=(Mpad // TM,),
        in_specs=[
            pl.BlockSpec((TM, Cin), lambda i: (i, 0)),
            pl.BlockSpec((Cin, Cout), lambda i: (0, 0)),
            pl.BlockSpec((1, Cout), lambda i: (0, 0)),
            pl.BlockSpec((1, Cout), lambda i: (0, 0)),
        ],
        out_specs=pl.BlockSpec((TM, Cout), lambda i: (i, 0)),
        compiler_params=pltpu.CompilerParams(
            dimension_semantics=("parallel",), vmem_limit_bytes=_VMEM_LIMIT),
    )(xr, w, scale.reshape(1, Cout), shift.reshape(1, Cout))

    if Mpad != M:
        out = out[:M]
    return out.reshape(N, H, W, Cout)


def conv3x3_bn_relu(x_nhwc, w, bias, bn, relu=True):
    """3x3 conv, stride 1, padding 1 (+BN+act).  w: (3, 3, Cin, Cout)."""
    N, H, W, Cin = x_nhwc.shape
    Cout = w.shape[-1]
    scale, shift = _fold_bn(bias, bn, Cout)
    TH = _pick_th(H)
    T = H // TH

    kern = functools.partial(_conv3x3_halo_kernel, TH=TH, W=W, Cin=Cin, relu=relu)
    out = pl.pallas_call(
        kern,
        out_shape=jax.ShapeDtypeStruct((N * T, TH * W, Cout), jnp.float32),
        grid=(N, T),
        in_specs=[
            pl.BlockSpec(memory_space=pl.ANY),                 # unpadded input in HBM
            pl.BlockSpec((9 * Cin, Cout), lambda n, t: (0, 0)),
            pl.BlockSpec((1, Cout), lambda n, t: (0, 0)),
            pl.BlockSpec((1, Cout), lambda n, t: (0, 0)),
        ],
        out_specs=pl.BlockSpec((1, TH * W, Cout), lambda n, t: (n * T + t, 0, 0)),
        scratch_shapes=[
            pltpu.VMEM((2, TH + 2, W + 2, Cin), jnp.float32),  # double-buffered halo
            pltpu.SemaphoreType.DMA((2, 3)),
        ],
        compiler_params=pltpu.CompilerParams(
            dimension_semantics=("parallel", "arbitrary"),
            vmem_limit_bytes=_VMEM_LIMIT),
    )(x_nhwc, w.reshape(9 * Cin, Cout), scale.reshape(1, Cout), shift.reshape(1, Cout))
    return out.reshape(N, H, W, Cout)


def conv1x1_bn_relu_plus_shortcut(h_nhwc, x_nhwc, w, bias, bn, wsc, bsc):
    """Last conv1x1 + BN + ReLU, with the shortcut conv1x1(x) + add fused in."""
    N, H, W, Cmid = h_nhwc.shape
    Cin = x_nhwc.shape[-1]
    Cout = w.shape[-1]
    scale, shift = _fold_bn(bias, bn, Cout)

    M = N * H * W
    TM = _pick_tm(M, Cmid + Cin + Cout)
    Mpad = _round_up(M, TM)
    hr = h_nhwc.reshape(M, Cmid)
    xr = x_nhwc.reshape(M, Cin)
    if Mpad != M:
        hr = jnp.pad(hr, ((0, Mpad - M), (0, 0)))
        xr = jnp.pad(xr, ((0, Mpad - M), (0, 0)))

    out = pl.pallas_call(
        _conv1x1_bn_relu_res_kernel,
        out_shape=jax.ShapeDtypeStruct((Mpad, Cout), jnp.float32),
        grid=(Mpad // TM,),
        in_specs=[
            pl.BlockSpec((TM, Cmid), lambda i: (i, 0)),
            pl.BlockSpec((TM, Cin), lambda i: (i, 0)),
            pl.BlockSpec((Cmid, Cout), lambda i: (0, 0)),
            pl.BlockSpec((1, Cout), lambda i: (0, 0)),
            pl.BlockSpec((1, Cout), lambda i: (0, 0)),
            pl.BlockSpec((Cin, Cout), lambda i: (0, 0)),
            pl.BlockSpec((1, Cout), lambda i: (0, 0)),
        ],
        out_specs=pl.BlockSpec((TM, Cout), lambda i: (i, 0)),
        compiler_params=pltpu.CompilerParams(
            dimension_semantics=("parallel",), vmem_limit_bytes=_VMEM_LIMIT),
    )(hr, xr, w, scale.reshape(1, Cout), shift.reshape(1, Cout),
      wsc, bsc.reshape(1, Cout))

    if Mpad != M:
        out = out[:M]
    return out.reshape(N, H, W, Cout)


# --------------------------------------------------------------------------------------
# BottleNeck forward
# --------------------------------------------------------------------------------------
def bottleneck_forward(x_nchw, p, down):
    x = jnp.transpose(x_nchw, (0, 2, 3, 1))                   # NCHW -> NHWC
    if down:
        # TODO(synk): fold the stride-2 subsampling into kernel-1's DMA (strided pl.ds
        # from HBM) instead of this XLA-level strided slice (one extra HBM round trip).
        xs = x[:, ::2, ::2, :]
        sc_w, sc_b = p["down_w"], p["down_b"]
    else:
        # PyTorch quirk: `x.size() is not out.size()` is always True -> always equalize.
        xs = x
        sc_w, sc_b = p["eq_w"], p["eq_b"]

    h = conv1x1_bn_relu(xs, p["w1"], p["b1"], p["bn1"])
    h = conv3x3_bn_relu(h, p["w2"], p["b2"], p["bn2"], relu=True)
    out = conv1x1_bn_relu_plus_shortcut(h, xs, p["w3"], p["b3"], p["bn3"], sc_w, sc_b)
    return jnp.transpose(out, (0, 3, 1, 2))                   # NHWC -> NCHW


# --------------------------------------------------------------------------------------
# Pure-JAX reference (for correctness check)
# --------------------------------------------------------------------------------------
def bottleneck_reference(x_nchw, p, down):
    x = jnp.transpose(x_nchw, (0, 2, 3, 1))

    def c1(xx, w, b, stride=1):
        return jax.lax.conv_general_dilated(
            xx, w.reshape(1, 1, *w.shape), (stride, stride), "VALID",
            dimension_numbers=("NHWC", "HWIO", "NHWC")) + b

    def c3(xx, w, b):
        return jax.lax.conv_general_dilated(
            xx, w, (1, 1), ((1, 1), (1, 1)),
            dimension_numbers=("NHWC", "HWIO", "NHWC")) + b

    def bn_relu(y, bn):
        g, be, m, v, eps = bn
        return jnp.maximum(g * (y - m) * jax.lax.rsqrt(v + eps) + be, 0.0)

    if down:
        ds = c1(x, p["down_w"], p["down_b"], stride=2)
        h = bn_relu(c1(x, p["w1"], p["b1"], stride=2), p["bn1"])
        h = bn_relu(c3(h, p["w2"], p["b2"]), p["bn2"])
        h = bn_relu(c1(h, p["w3"], p["b3"]), p["bn3"])
        out = h + ds
    else:
        h = bn_relu(c1(x, p["w1"], p["b1"]), p["bn1"])
        h = bn_relu(c3(h, p["w2"], p["b2"]), p["bn2"])
        h = bn_relu(c1(h, p["w3"], p["b3"]), p["bn3"])
        out = h + c1(x, p["eq_w"], p["eq_b"])
    return jnp.transpose(out, (0, 3, 1, 2))


# --------------------------------------------------------------------------------------
# Deterministic parameter construction
# --------------------------------------------------------------------------------------
def make_params(key, in_dim, mid_dim, out_dim, down):
    ks = jax.random.split(key, 8)

    def conv1x1_p(k, ci, co):
        kw, kb = jax.random.split(k)
        return (0.3 * jax.random.normal(kw, (ci, co), jnp.float32),
                0.1 * jax.random.normal(kb, (co,), jnp.float32))

    def conv3x3_p(k, ci, co):
        kw, kb = jax.random.split(k)
        return (0.3 * jax.random.normal(kw, (3, 3, ci, co), jnp.float32),
                0.1 * jax.random.normal(kb, (co,), jnp.float32))

    def bn_p(k, c):
        k1, k2, k3, k4 = jax.random.split(k, 4)
        gamma = 1.0 + 0.1 * jax.random.normal(k1, (c,), jnp.float32)
        beta = 0.1 * jax.random.normal(k2, (c,), jnp.float32)
        mean = 0.1 * jax.random.normal(k3, (c,), jnp.float32)
        var = 1.0 + 0.1 * jax.random.uniform(k4, (c,), jnp.float32)
        return (gamma, beta, mean, var, 1e-5)

    p = {}
    p["w1"], p["b1"] = conv1x1_p(ks[0], in_dim, mid_dim)
    p["bn1"] = bn_p(ks[1], mid_dim)
    p["w2"], p["b2"] = conv3x3_p(ks[2], mid_dim, mid_dim)
    p["bn2"] = bn_p(ks[3], mid_dim)
    p["w3"], p["b3"] = conv1x1_p(ks[4], mid_dim, out_dim)
    p["bn3"] = bn_p(ks[5], out_dim)
    if down:
        p["down_w"], p["down_b"] = conv1x1_p(ks[6], in_dim, out_dim)
    p["eq_w"], p["eq_b"] = conv1x1_p(ks[7], in_dim, out_dim)
    return p


# --------------------------------------------------------------------------------------
if __name__ == "__main__":
    key = jax.random.PRNGKey(0)
    kx, kp_false, kp_true = jax.random.split(key, 3)

    in_dim, mid_dim, out_dim = 4, 4, 8
    x = jax.random.normal(kx, (2, in_dim, 16, 16), jnp.float32)  # NCHW, like PyTorch

    for down, kp in ((False, kp_false), (True, kp_true)):
        params = make_params(kp, in_dim, mid_dim, out_dim, down)
        out = bottleneck_forward(x, params, down)
        out = jax.block_until_ready(out)
        ref = bottleneck_reference(x, params, down)
        np.testing.assert_allclose(np.asarray(out), np.asarray(ref),
                                   rtol=2e-4, atol=2e-4)

    print("KERNEL_OK")
</pallas_src>

<mosaic_0001>
module attributes {stable_mosaic.version = 11 : i64} {
  func.func @_conv1x1_bn_relu_kernel(%arg0: i32, %arg1: memref<512x4xf32, #tpu.memory_space<vmem>>, %arg2: memref<4x4xf32, #tpu.memory_space<vmem>>, %arg3: memref<1x4xf32, #tpu.memory_space<vmem>>, %arg4: memref<1x4xf32, #tpu.memory_space<vmem>>, %arg5: memref<512x4xf32, #tpu.memory_space<vmem>>) attributes {dimension_semantics = [#tpu.dimension_semantics<parallel>], iteration_bounds = array<i64: 1>, scalar_prefetch = 0 : i64, scratch_operands = 0 : i64, tpu.core_type = #tpu.core_type<tc>, window_params = [{transform_indices = @transform_0, window_bounds = array<i64: 512, 4>}, {pipeline_mode = #tpu.pipeline_mode<synchronous>, transform_indices = @transform_1, window_bounds = array<i64: 4, 4>}, {pipeline_mode = #tpu.pipeline_mode<synchronous>, transform_indices = @transform_2, window_bounds = array<i64: 1, 4>}, {pipeline_mode = #tpu.pipeline_mode<synchronous>, transform_indices = @transform_3, window_bounds = array<i64: 1, 4>}, {transform_indices = @transform_4, window_bounds = array<i64: 512, 4>}]} {
    %c0 = arith.constant 0 : index
    %c0_0 = arith.constant 0 : index
    %0 = vector.load %arg1[%c0, %c0_0] : memref<512x4xf32, #tpu.memory_space<vmem>>, vector<512x4xf32>
    %c0_1 = arith.constant 0 : index
    %c0_2 = arith.constant 0 : index
    %1 = vector.load %arg2[%c0_1, %c0_2] : memref<4x4xf32, #tpu.memory_space<vmem>>, vector<4x4xf32>
    %cst = arith.constant dense<0.000000e+00> : vector<512x4xf32>
    %2 = tpu.matmul %0, %1, %cst {dimension_numbers = #tpu.dot_dimension_numbers<[1], [0], [0], [1], [0, 0, 1, 1], [], []>} : vector<512x4xf32>, vector<4x4xf32>, vector<512x4xf32> -> vector<512x4xf32>
    %c0_3 = arith.constant 0 : index
    %c0_4 = arith.constant 0 : index
    %3 = vector.load %arg3[%c0_3, %c0_4] : memref<1x4xf32, #tpu.memory_space<vmem>>, vector<1x4xf32>
    %4 = vector.broadcast %3 : vector<1x4xf32> to vector<512x4xf32>
    %5 = arith.mulf %2, %4 : vector<512x4xf32>
    %c0_5 = arith.constant 0 : index
    %c0_6 = arith.constant 0 : index
    %6 = vector.load %arg4[%c0_5, %c0_6] : memref<1x4xf32, #tpu.memory_space<vmem>>, vector<1x4xf32>
    %7 = vector.broadcast %6 : vector<1x4xf32> to vector<512x4xf32>
    %8 = arith.addf %5, %7 : vector<512x4xf32>
    %cst_7 = arith.constant 0.000000e+00 : f32
    %9 = vector.broadcast %cst_7 : f32 to vector<512x4xf32>
    %10 = arith.maximumf %8, %9 : vector<512x4xf32>
    %c0_8 = arith.constant 0 : index
    %c0_9 = arith.constant 0 : index
    %11 = vector.load %arg5[%c0_8, %c0_9] : memref<512x4xf32, #tpu.memory_space<vmem>>, vector<512x4xf32>
    tpu.vector_store %arg5[%c0_8, %c0_9], %10 {strides = array<i32>} : memref<512x4xf32, #tpu.memory_space<vmem>>, vector<512x4xf32>,
    return
  }
  func.func @transform_0(%arg0: i32) -> (i32, i32) {
    %c0_i32 = arith.constant 0 : i32
    %c0_i32_0 = arith.constant 0 : i32
    return %arg0, %c0_i32 : i32, i32
  }
  func.func @transform_1(%arg0: i32) -> (i32, i32) {
    %c0_i32 = arith.constant 0 : i32
    %c0_i32_0 = arith.constant 0 : i32
    %c0_i32_1 = arith.constant 0 : i32
    return %c0_i32, %c0_i32_0 : i32, i32
  }
  func.func @transform_2(%arg0: i32) -> (i32, i32) {
    %c0_i32 = arith.constant 0 : i32
    %c0_i32_0 = arith.constant 0 : i32
    %c0_i32_1 = arith.constant 0 : i32
    return %c0_i32, %c0_i32_0 : i32, i32
  }
  func.func @transform_3(%arg0: i32) -> (i32, i32) {
    %c0_i32 = arith.constant 0 : i32
    %c0_i32_0 = arith.constant 0 : i32
    %c0_i32_1 = arith.constant 0 : i32
    return %c0_i32, %c0_i32_0 : i32, i32
  }
  func.func @transform_4(%arg0: i32) -> (i32, i32) {
    %c0_i32 = arith.constant 0 : i32
    %c0_i32_0 = arith.constant 0 : i32
    return %arg0, %c0_i32 : i32, i32
  }
}

</mosaic_0001>

<llo_original>
// kernel: tpu_custom_call.1
$region0: #{tpu_custom_call.1}
  #allocation0 [shape = 'u32[]', space=smem, size = 0x4, offset = 0x4, fixed_abs, tag = 'smem constant byte address 0x4 - core index']
  #allocation1 [shape = 'u32[144,128]{1,0:T(1,128)}', space=vmem, size = 0x12000, scoped, tag = 'internal scratch']
  %s0 = inlined_call_operand.vmem [shape: f32[512,4], index: 0, kind: input, shape index: {}]
  %s1 = inlined_call_operand.vmem [shape: f32[4,4], index: 1, kind: input, shape index: {}]
  %s2 = inlined_call_operand.vmem [shape: f32[1,4], index: 2, kind: input, shape index: {}]
  %s3 = inlined_call_operand.vmem [shape: f32[1,4], index: 3, kind: input, shape index: {}]
  %s4 = inlined_call_operand.vmem [shape: f32[512,4], index: 4, kind: output, shape index: {}]
  %s5 = sld [smem:[#allocation0]]
  $region26: #{tpu_custom_call.1} parent=0
    _
  %s7 = ssub.s32 1, %s5
  %s8 = scalar_select 0, %s7, %s5
  // Predicated region
  $region2: #{tpu_custom_call.1} parent=0 // pred_check
    _
  $region3: #{tpu_custom_call.1} parent=0 // pred_check_branch
    %10 = sbr.rel (0) target = $region5
  $region4: #{tpu_custom_call.1} parent=0 // pred_region
    _
  $region5: #{tpu_custom_call.1} parent=0 // pred_fallthru
    _
  // Predicated region
  $region6: #{tpu_custom_call.1} parent=0 // pred_check
    _
  $region7: #{tpu_custom_call.1} parent=0 // pred_check_branch
    %12 = sbr.rel (0) target = $region9
  $region8: #{tpu_custom_call.1} parent=0 // pred_region
    _
  $region9: #{tpu_custom_call.1} parent=0 // pred_fallthru
    _
  // Predicated region
  $region10: #{tpu_custom_call.1} parent=0 // pred_check
    _
  $region11: #{tpu_custom_call.1} parent=0 // pred_check_branch
    %14 = sbr.rel (0) target = $region13
  $region12: #{tpu_custom_call.1} parent=0 // pred_region
    _
  $region13: #{tpu_custom_call.1} parent=0 // pred_fallthru
    _
  // Predicated region
  $region14: #{tpu_custom_call.1} parent=0 // pred_check
    _
  $region15: #{tpu_custom_call.1} parent=0 // pred_check_branch
    %16 = sbr.rel (0) target = $region17
  $region16: #{tpu_custom_call.1} parent=0 // pred_region
    _
  $region17: #{tpu_custom_call.1} parent=0 // pred_fallthru
    _
  %v17 = vld [vmem:[%s0] sm:$0xff]
  %v18 = vld [vmem:[%s0 + $0x8] sm:$0xff]
  %v19 = vld [vmem:[%s0 + $0x10] sm:$0xff]
  %v20 = vld [vmem:[%s0 + $0x18] sm:$0xff]
  %v21 = vld [vmem:[%s0 + $0x20] sm:$0xff]
  %v22 = vld [vmem:[%s0 + $0x28] sm:$0xff]
  %v23 = vld [vmem:[%s0 + $0x30] sm:$0xff]
  %v24 = vld [vmem:[%s0 + $0x38] sm:$0xff]
  %v25 = vld [vmem:[%s0 + $0x40] sm:$0xff]
  %v26 = vld [vmem:[%s0 + $0x48] sm:$0xff]
  %v27 = vld [vmem:[%s0 + $0x50] sm:$0xff]
  %v28 = vld [vmem:[%s0 + $0x58] sm:$0xff]
  %v29 = vld [vmem:[%s0 + $0x60] sm:$0xff]
  %v30 = vld [vmem:[%s0 + $0x68] sm:$0xff]
  %v31 = vld [vmem:[%s0 + $0x70] sm:$0xff]
  %v32 = vld [vmem:[%s0 + $0x78] sm:$0xff]
  %v33 = vld [vmem:[%s0 + $0x80] sm:$0xff]
  %v34 = vld [vmem:[%s0 + $0x88] sm:$0xff]
  %v35 = vld [vmem:[%s0 + $0x90] sm:$0xff]
  %v36 = vld [vmem:[%s0 + $0x98] sm:$0xff]
  %v37 = vld [vmem:[%s0 + $0xa0] sm:$0xff]
  %v38 = vld [vmem:[%s0 + $0xa8] sm:$0xff]
  %v39 = vld [vmem:[%s0 + $0xb0] sm:$0xff]
  %v40 = vld [vmem:[%s0 + $0xb8] sm:$0xff]
  %v41 = vld [vmem:[%s0 + $0xc0] sm:$0xff]
  %v42 = vld [vmem:[%s0 + $0xc8] sm:$0xff]
  %v43 = vld [vmem:[%s0 + $0xd0] sm:$0xff]
  %v44 = vld [vmem:[%s0 + $0xd8] sm:$0xff]
  %v45 = vld [vmem:[%s0 + $0xe0] sm:$0xff]
  %v46 = vld [vmem:[%s0 + $0xe8] sm:$0xff]
  %v47 = vld [vmem:[%s0 + $0xf0] sm:$0xff]
  %v48 = vld [vmem:[%s0 + $0xf8] sm:$0xff]
  %v49 = vld [vmem:[%s0 + $0x100] sm:$0xff]
  %v50 = vld [vmem:[%s0 + $0x108] sm:$0xff]
  %v51 = vld [vmem:[%s0 + $0x110] sm:$0xff]
  %v52 = vld [vmem:[%s0 + $0x118] sm:$0xff]
  %v53 = vld [vmem:[%s0 + $0x120] sm:$0xff]
  %v54 = vld [vmem:[%s0 + $0x128] sm:$0xff]
  %v55 = vld [vmem:[%s0 + $0x130] sm:$0xff]
  %v56 = vld [vmem:[%s0 + $0x138] sm:$0xff]
  %v57 = vld [vmem:[%s0 + $0x140] sm:$0xff]
  %v58 = vld [vmem:[%s0 + $0x148] sm:$0xff]
  %v59 = vld [vmem:[%s0 + $0x150] sm:$0xff]
  %v60 = vld [vmem:[%s0 + $0x158] sm:$0xff]
  %v61 = vld [vmem:[%s0 + $0x160] sm:$0xff]
  %v62 = vld [vmem:[%s0 + $0x168] sm:$0xff]
  %v63 = vld [vmem:[%s0 + $0x170] sm:$0xff]
  %v64 = vld [vmem:[%s0 + $0x178] sm:$0xff]
  %v65 = vld [vmem:[%s0 + $0x180] sm:$0xff]
  %v66 = vld [vmem:[%s0 + $0x188] sm:$0xff]
  %v67 = vld [vmem:[%s0 + $0x190] sm:$0xff]
  %v68 = vld [vmem:[%s0 + $0x198] sm:$0xff]
  %v69 = vld [vmem:[%s0 + $0x1a0] sm:$0xff]
  %v70 = vld [vmem:[%s0 + $0x1a8] sm:$0xff]
  %v71 = vld [vmem:[%s0 + $0x1b0] sm:$0xff]
  %v72 = vld [vmem:[%s0 + $0x1b8] sm:$0xff]
  %v73 = vld [vmem:[%s0 + $0x1c0] sm:$0xff]
  %v74 = vld [vmem:[%s0 + $0x1c8] sm:$0xff]
  %v75 = vld [vmem:[%s0 + $0x1d0] sm:$0xff]
  %v76 = vld [vmem:[%s0 + $0x1d8] sm:$0xff]
  %v77 = vld [vmem:[%s0 + $0x1e0] sm:$0xff]
  %v78 = vld [vmem:[%s0 + $0x1e8] sm:$0xff]
  %v79 = vld [vmem:[%s0 + $0x1f0] sm:$0xff]
  %v80 = vld [vmem:[%s0 + $0x1f8] sm:$0xff]
  %v81 = vld [vmem:[%s1] sm:$0xf]
  %vm82 = vcmask 31744
  %v84 = vsel %vm82, %v17, 0
  %v87 = vsel %vm82, %v18, 0
  %v90 = vsel %vm82, %v19, 0
  %v93 = vsel %vm82, %v20, 0
  %v96 = vsel %vm82, %v21, 0
  %v99 = vsel %vm82, %v22, 0
  %v102 = vsel %vm82, %v23, 0
  %v105 = vsel %vm82, %v24, 0
  %v108 = vsel %vm82, %v25, 0
  %v111 = vsel %vm82, %v26, 0
  %v114 = vsel %vm82, %v27, 0
  %v117 = vsel %vm82, %v28, 0
  %v120 = vsel %vm82, %v29, 0
  %v123 = vsel %vm82, %v30, 0
  %v126 = vsel %vm82, %v31, 0
  %v129 = vsel %vm82, %v32, 0
  %v132 = vsel %vm82, %v33, 0
  %v135 = vsel %vm82, %v34, 0
  %v138 = vsel %vm82, %v35, 0
  %v141 = vsel %vm82, %v36, 0
  %v144 = vsel %vm82, %v37, 0
  %v147 = vsel %vm82, %v38, 0
  %v150 = vsel %vm82, %v39, 0
  %v153 = vsel %vm82, %v40, 0
  %v156 = vsel %vm82, %v41, 0
  %v159 = vsel %vm82, %v42, 0
  %v162 = vsel %vm82, %v43, 0
  %v165 = vsel %vm82, %v44, 0
  %v168 = vsel %vm82, %v45, 0
  %v171 = vsel %vm82, %v46, 0
  %v174 = vsel %vm82, %v47, 0
  %v177 = vsel %vm82, %v48, 0
  %v180 = vsel %vm82, %v49, 0
  %v183 = vsel %vm82, %v50, 0
  %v186 = vsel %vm82, %v51, 0
  %v189 = vsel %vm82, %v52, 0
  %v192 = vsel %vm82, %v53, 0
  %v195 = vsel %vm82, %v54, 0
  %v198 = vsel %vm82, %v55, 0
  %v201 = vsel %vm82, %v56, 0
  %v204 = vsel %vm82, %v57, 0
  %v207 = vsel %vm82, %v58, 0
  %v210 = vsel %vm82, %v59, 0
  %v213 = vsel %vm82, %v60, 0
  %v216 = vsel %vm82, %v61, 0
  %v219 = vsel %vm82, %v62, 0
  %v222 = vsel %vm82, %v63, 0
  %v225 = vsel %vm82, %v64, 0
  %v228 = vsel %vm82, %v65, 0
  %v231 = vsel %vm82, %v66, 0
  %v234 = vsel %vm82, %v67, 0
  %v237 = vsel %vm82, %v68, 0
  %v240 = vsel %vm82, %v69, 0
  %v243 = vsel %vm82, %v70, 0
  %v246 = vsel %vm82, %v71, 0
  %v249 = vsel %vm82, %v72, 0
  %v252 = vsel %vm82, %v73, 0
  %v255 = vsel %vm82, %v74, 0
  %v258 = vsel %vm82, %v75, 0
  %v261 = vsel %vm82, %v76, 0
  %v264 = vsel %vm82, %v77, 0
  %v267 = vsel %vm82, %v78, 0
  %v270 = vsel %vm82, %v79, 0
  %v273 = vsel %vm82, %v80, 0
  %vm275 = vcmask 1043456
  %v277 = vsel %vm275, %v81, 0
  %279 = vmatprep.subr.mxu0 0.0
  %280 = vmatpush1.msra.mxu0 0.0
  %281 = vmatprep.subr.mxu0 0.0
  %282 = vmatpush1.msra.mxu0 0.0
  %283 = vmatprep.subr.mxu0 0.0
  %284 = vmatpush1.msra.mxu0 0.0
  %285 = vmatprep.subr.mxu0 0.0
  %286 = vmatpush1.msra.mxu0 0.0
  %287 = vmatprep.subr.mxu0 0.0
  %288 = vmatpush1.msra.mxu0 0.0
  %289 = vmatprep.subr.mxu0 0.0
  %290 = vmatpush1.msra.mxu0 0.0
  %291 = vmatprep.subr.mxu0 0.0
  %292 = vmatpush1.msra.mxu0 0.0
  %293 = vmatprep.subr.mxu0 0.0
  %294 = vmatpush1.msra.mxu0 0.0
  %295 = vmatprep.subr.mxu0 0.0
  %296 = vmatpush1.msra.mxu0 0.0
  %297 = vmatprep.subr.mxu0 0.0
  %298 = vmatpush1.msra.mxu0 0.0
  %299 = vmatprep.subr.mxu0 0.0
  %300 = vmatpush1.msra.mxu0 0.0
  %301 = vmatprep.subr.mxu0 0.0
  %302 = vmatpush1.msra.mxu0 0.0
  %303 = vmatprep.subr.mxu0 0.0
  %304 = vmatpush1.msra.mxu0 0.0
  %305 = vmatprep.subr.mxu0 0.0
  %306 = vmatpush1.msra.mxu0 0.0
  %307 = vmatprep.subr.mxu0 0.0
  %308 = vmatpush1.msra.mxu0 0.0
  %309 = vmatprep.subr.mxu0 0.0
  %310 = vmatpush1.msra.mxu0 %v277
  %311 = vmatprep.subr.mxu0 0.0
  %312 = vmatpush2.msra.mxu0 0.0
  %313 = vmatprep.subr.mxu0 0.0
  %314 = vmatpush2.msra.mxu0 0.0
  %315 = vmatprep.subr.mxu0 0.0
  %316 = vmatpush2.msra.mxu0 0.0
  %317 = vmatprep.subr.mxu0 0.0
  %318 = vmatpush2.msra.mxu0 0.0
  %319 = vmatprep.subr.mxu0 0.0
  %320 = vmatpush2.msra.mxu0 0.0
  %321 = vmatprep.subr.mxu0 0.0
  %322 = vmatpush2.msra.mxu0 0.0
  %323 = vmatprep.subr.mxu0 0.0
  %324 = vmatpush2.msra.mxu0 0.0
  %325 = vmatprep.subr.mxu0 0.0
  %326 = vmatpush2.msra.mxu0 0.0
  %327 = vmatprep.subr.mxu0 0.0
  %328 = vmatpush2.msra.mxu0 0.0
  %329 = vmatprep.subr.mxu0 0.0
  %330 = vmatpush2.msra.mxu0 0.0
  %331 = vmatprep.subr.mxu0 0.0
  %332 = vmatpush2.msra.mxu0 0.0
  %333 = vmatprep.subr.mxu0 0.0
  %334 = vmatpush2.msra.mxu0 0.0
  %335 = vmatprep.subr.mxu0 0.0
  %336 = vmatpush2.msra.mxu0 0.0
  %337 = vmatprep.subr.mxu0 0.0
  %338 = vmatpush2.msra.mxu0 0.0
  %339 = vmatprep.subr.mxu0 0.0
  %340 = vmatpush2.msra.mxu0 0.0
  %341 = vmatprep.subr.mxu0 0.0
  %342 = vmatpush2.msra.mxu0 0.0
  %343 = vmatprep.mubr.f32.mxu0 0.0
  %344 = vmatmul.mubr.f32.gmra.mxu0 %v84
  %v345 = vpop.f32.mrf.mxu0
  %v346 = vadd.f32 0.0, %v345
  %v347 = vpop.f32.mrf.mxu0
  %348 = vmatprep.mubr.f32.mxu0 0.0
  %349 = vmatmul.mubr.f32.gmra.mxu0 %v87
  %v350 = vpop.f32.mrf.mxu0
  %v351 = vadd.f32 0.0, %v350
  %v352 = vpop.f32.mrf.mxu0
  %353 = vmatprep.mubr.f32.mxu0 0.0
  %354 = vmatmul.mubr.f32.gmra.mxu0 %v90
  %v355 = vpop.f32.mrf.mxu0
  %v356 = vadd.f32 0.0, %v355
  %v357 = vpop.f32.mrf.mxu0
  %358 = vmatprep.mubr.f32.mxu0 0.0
  %359 = vmatmul.mubr.f32.gmra.mxu0 %v93
  %v360 = vpop.f32.mrf.mxu0
  %v361 = vadd.f32 0.0, %v360
  %v362 = vpop.f32.mrf.mxu0
  %363 = vmatprep.mubr.f32.mxu0 0.0
  %364 = vmatmul.mubr.f32.gmra.mxu0 %v96
  %v365 = vpop.f32.mrf.mxu0
  %v366 = vadd.f32 0.0, %v365
  %v367 = vpop.f32.mrf.mxu0
  %368 = vmatprep.mubr.f32.mxu0 0.0
  %369 = vmatmul.mubr.f32.gmra.mxu0 %v99
  %v370 = vpop.f32.mrf.mxu0
  %v371 = vadd.f32 0.0, %v370
  %v372 = vpop.f32.mrf.mxu0
  %373 = vmatprep.mubr.f32.mxu0 0.0
  %374 = vmatmul.mubr.f32.gmra.mxu0 %v102
  %v375 = vpop.f32.mrf.mxu0
  %v376 = vadd.f32 0.0, %v375
  %v377 = vpop.f32.mrf.mxu0
  %378 = vmatprep.mubr.f32.mxu0 0.0
  %379 = vmatmul.mubr.f32.gmra.mxu0 %v105
  %v380 = vpop.f32.mrf.mxu0
  %v381 = vadd.f32 0.0, %v380
  %v382 = vpop.f32.mrf.mxu0
  %383 = vmatprep.mubr.f32.mxu0 0.0
  %384 = vmatmul.mubr.f32.gmra.mxu0 %v108
  %v385 = vpop.f32.mrf.mxu0
  %v386 = vadd.f32 0.0, %v385
  %v387 = vpop.f32.mrf.mxu0
  %388 = vmatprep.mubr.f32.mxu0 0.0
  %389 = vmatmul.mubr.f32.gmra.mxu0 %v111
  %v390 = vpop.f32.mrf.mxu0
  %v391 = vadd.f32 0.0, %v390
  %v392 = vpop.f32.mrf.mxu0
  %393 = vmatprep.mubr.f32.mxu0 0.0
  %394 = vmatmul.mubr.f32.gmra.mxu0 %v114
  %v395 = vpop.f32.mrf.mxu0
  %v396 = vadd.f32 0.0, %v395
  %v397 = vpop.f32.mrf.mxu0
  %398 = vmatprep.mubr.f32.mxu0 0.0
  %399 = vmatmul.mubr.f32.gmra.mxu0 %v117
  %v400 = vpop.f32.mrf.mxu0
  %v401 = vadd.f32 0.0, %v400
  %v402 = vpop.f32.mrf.mxu0
  %403 = vmatprep.mubr.f32.mxu0 0.0
  %404 = vmatmul.mubr.f32.gmra.mxu0 %v120
  %v405 = vpop.f32.mrf.mxu0
  %v406 = vadd.f32 0.0, %v405
  %v407 = vpop.f32.mrf.mxu0
  %408 = vmatprep.mubr.f32.mxu0 0.0
  %409 = vmatmul.mubr.f32.gmra.mxu0 %v123
  %v410 = vpop.f32.mrf.mxu0
  %v411 = vadd.f32 0.0, %v410
  %v412 = vpop.f32.mrf.mxu0
  %413 = vmatprep.mubr.f32.mxu0 0.0
  %414 = vmatmul.mubr.f32.gmra.mxu0 %v126
  %v415 = vpop.f32.mrf.mxu0
  %v416 = vadd.f32 0.0, %v415
  %v417 = vpop.f32.mrf.mxu0
  %418 = vmatprep.mubr.f32.mxu0 0.0
  %419 = vmatmul.mubr.f32.gmra.mxu0 %v129
  %v420 = vpop.f32.mrf.mxu0
  %v421 = vadd.f32 0.0, %v420
  %v422 = vpop.f32.mrf.mxu0
  %423 = vmatprep.mubr.f32.mxu0 0.0
  %424 = vmatmul.mubr.f32.gmra.mxu0 %v132
  %v425 = vpop.f32.mrf.mxu0
  %v426 = vadd.f32 0.0, %v425
  %v427 = vpop.f32.mrf.mxu0
  %428 = vmatprep.mubr.f32.mxu0 0.0
  %429 = vmatmul.mubr.f32.gmra.mxu0 %v135
  %v430 = vpop.f32.mrf.mxu0
  %v431 = vadd.f32 0.0, %v430
  %v432 = vpop.f32.mrf.mxu0
  %433 = vmatprep.mubr.f32.mxu0 0.0
  %434 = vmatmul.mubr.f32.gmra.mxu0 %v138
  %v435 = vpop.f32.mrf.mxu0
  %v436 = vadd.f32 0.0, %v435
  %v437 = vpop.f32.mrf.mxu0
  %438 = vmatprep.mubr.f32.mxu0 0.0
  %439 = vmatmul.mubr.f32.gmra.mxu0 %v141
  %v440 = vpop.f32.mrf.mxu0
  %v441 = vadd.f32 0.0, %v440
  %v442 = vpop.f32.mrf.mxu0
  %443 = vmatprep.mubr.f32.mxu0 0.0
  %444 = vmatmul.mubr.f32.gmra.mxu0 %v144
  %v445 = vpop.f32.mrf.mxu0
  %v446 = vadd.f32 0.0, %v445
  %v447 = vpop.f32.mrf.mxu0
  %448 = vmatprep.mubr.f32.mxu0 0.0
  %449 = vmatmul.mubr.f32.gmra.mxu0 %v147
  %v450 = vpop.f32.mrf.mxu0
  %v451 = vadd.f32 0.0, %v450
  %v452 = vpop.f32.mrf.mxu0
  %453 = vmatprep.mubr.f32.mxu0 0.0
  %454 = vmatmul.mubr.f32.gmra.mxu0 %v150
  %v455 = vpop.f32.mrf.mxu0
  %v456 = vadd.f32 0.0, %v455
  %v457 = vpop.f32.mrf.mxu0
  %458 = vmatprep.mubr.f32.mxu0 0.0
  %459 = vmatmul.mubr.f32.gmra.mxu0 %v153
  %v460 = vpop.f32.mrf.mxu0
  %v461 = vadd.f32 0.0, %v460
  %v462 = vpop.f32.mrf.mxu0
  %463 = vmatprep.mubr.f32.mxu0 0.0
  %464 = vmatmul.mubr.f32.gmra.mxu0 %v156
  %v465 = vpop.f32.mrf.mxu0
  %v466 = vadd.f32 0.0, %v465
  %v467 = vpop.f32.mrf.mxu0
  %468 = vmatprep.mubr.f32.mxu0 0.0
  %469 = vmatmul.mubr.f32.gmra.mxu0 %v159
  %v470 = vpop.f32.mrf.mxu0
  %v471 = vadd.f32 0.0, %v470
  %v472 = vpop.f32.mrf.mxu0
  %473 = vmatprep.mubr.f32.mxu0 0.0
  %474 = vmatmul.mubr.f32.gmra.mxu0 %v162
  %v475 = vpop.f32.mrf.mxu0
  %v476 = vadd.f32 0.0, %v475
  %v477 = vpop.f32.mrf.mxu0
  %478 = vmatprep.mubr.f32.mxu0 0.0
  %479 = vmatmul.mubr.f32.gmra.mxu0 %v165
  %v480 = vpop.f32.mrf.mxu0
  %v481 = vadd.f32 0.0, %v480
  %v482 = vpop.f32.mrf.mxu0
  %483 = vmatprep.mubr.f32.mxu0 0.0
  %484 = vmatmul.mubr.f32.gmra.mxu0 %v168
  %v485 = vpop.f32.mrf.mxu0
  %v486 = vadd.f32 0.0, %v485
  %v487 = vpop.f32.mrf.mxu0
  %488 = vmatprep.mubr.f32.mxu0 0.0
  %489 = vmatmul.mubr.f32.gmra.mxu0 %v171
  %v490 = vpop.f32.mrf.mxu0
  %v491 = vadd.f32 0.0, %v490
  %v492 = vpop.f32.mrf.mxu0
  %493 = vmatprep.mubr.f32.mxu0 0.0
  %494 = vmatmul.mubr.f32.gmra.mxu0 %v174
  %v495 = vpop.f32.mrf.mxu0
  %v496 = vadd.f32 0.0, %v495
  %v497 = vpop.f32.mrf.mxu0
  %498 = vmatprep.mubr.f32.mxu0 0.0
  %499 = vmatmul.mubr.f32.gmra.mxu0 %v177
  %v500 = vpop.f32.mrf.mxu0
  %v501 = vadd.f32 0.0, %v500
  %v502 = vpop.f32.mrf.mxu0
  %503 = vmatprep.mubr.f32.mxu0 0.0
  %504 = vmatmul.mubr.f32.gmra.mxu0 %v180
  %v505 = vpop.f32.mrf.mxu0
  %v506 = vadd.f32 0.0, %v505
  %v507 = vpop.f32.mrf.mxu0
  %508 = vmatprep.mubr.f32.mxu0 0.0
  %509 = vmatmul.mubr.f32.gmra.mxu0 %v183
  %v510 = vpop.f32.mrf.mxu0
  %v511 = vadd.f32 0.0, %v510
  %v512 = vpop.f32.mrf.mxu0
  %513 = vmatprep.mubr.f32.mxu0 0.0
  %514 = vmatmul.mubr.f32.gmra.mxu0 %v186
  %v515 = vpop.f32.mrf.mxu0
  %v516 = vadd.f32 0.0, %v515
  %v517 = vpop.f32.mrf.mxu0
  %518 = vmatprep.mubr.f32.mxu0 0.0
  %519 = vmatmul.mubr.f32.gmra.mxu0 %v189
  %v520 = vpop.f32.mrf.mxu0
  %v521 = vadd.f32 0.0, %v520
  %v522 = vpop.f32.mrf.mxu0
  %523 = vmatprep.mubr.f32.mxu0 0.0
  %524 = vmatmul.mubr.f32.gmra.mxu0 %v192
  %v525 = vpop.f32.mrf.mxu0
  %v526 = vadd.f32 0.0, %v525
  %v527 = vpop.f32.mrf.mxu0
  %528 = vmatprep.mubr.f32.mxu0 0.0
  %529 = vmatmul.mubr.f32.gmra.mxu0 %v195
  %v530 = vpop.f32.mrf.mxu0
  %v531 = vadd.f32 0.0, %v530
  %v532 = vpop.f32.mrf.mxu0
  %533 = vmatprep.mubr.f32.mxu0 0.0
  %534 = vmatmul.mubr.f32.gmra.mxu0 %v198
  %v535 = vpop.f32.mrf.mxu0
  %v536 = vadd.f32 0.0, %v535
  %v537 = vpop.f32.mrf.mxu0
  %538 = vmatprep.mubr.f32.mxu0 0.0
  %539 = vmatmul.mubr.f32.gmra.mxu0 %v201
  %v540 = vpop.f32.mrf.mxu0
  %v541 = vadd.f32 0.0, %v540
  %v542 = vpop.f32.mrf.mxu0
  %543 = vmatprep.mubr.f32.mxu0 0.0
  %544 = vmatmul.mubr.f32.gmra.mxu0 %v204
  %v545 = vpop.f32.mrf.mxu0
  %v546 = vadd.f32 0.0, %v545
  %v547 = vpop.f32.mrf.mxu0
  %548 = vmatprep.mubr.f32.mxu0 0.0
  %549 = vmatmul.mubr.f32.gmra.mxu0 %v207
  %v550 = vpop.f32.mrf.mxu0
  %v551 = vadd.f32 0.0, %v550
  %v552 = vpop.f32.mrf.mxu0
  %553 = vmatprep.mubr.f32.mxu0 0.0
  %554 = vmatmul.mubr.f32.gmra.mxu0 %v210
  %v555 = vpop.f32.mrf.mxu0
  %v556 = vadd.f32 0.0, %v555
  %v557 = vpop.f32.mrf.mxu0
  %558 = vmatprep.mubr.f32.mxu0 0.0
  %559 = vmatmul.mubr.f32.gmra.mxu0 %v213
  %v560 = vpop.f32.mrf.mxu0
  %v561 = vadd.f32 0.0, %v560
  %v562 = vpop.f32.mrf.mxu0
  %563 = vmatprep.mubr.f32.mxu0 0.0
  %564 = vmatmul.mubr.f32.gmra.mxu0 %v216
  %v565 = vpop.f32.mrf.mxu0
  %v566 = vadd.f32 0.0, %v565
  %v567 = vpop.f32.mrf.mxu0
  %568 = vmatprep.mubr.f32.mxu0 0.0
  %569 = vmatmul.mubr.f32.gmra.mxu0 %v219
  %v570 = vpop.f32.mrf.mxu0
  %v571 = vadd.f32 0.0, %v570
  %v572 = vpop.f32.mrf.mxu0
  %573 = vmatprep.mubr.f32.mxu0 0.0
  %574 = vmatmul.mubr.f32.gmra.mxu0 %v222
  %v575 = vpop.f32.mrf.mxu0
  %v576 = vadd.f32 0.0, %v575
  %v577 = vpop.f32.mrf.mxu0
  %578 = vmatprep.mubr.f32.mxu0 0.0
  %579 = vmatmul.mubr.f32.gmra.mxu0 %v225
  %v580 = vpop.f32.mrf.mxu0
  %v581 = vadd.f32 0.0, %v580
  %v582 = vpop.f32.mrf.mxu0
  %583 = vmatprep.mubr.f32.mxu0 0.0
  %584 = vmatmul.mubr.f32.gmra.mxu0 %v228
  %v585 = vpop.f32.mrf.mxu0
  %v586 = vadd.f32 0.0, %v585
  %v587 = vpop.f32.mrf.mxu0
  %588 = vmatprep.mubr.f32.mxu0 0.0
  %589 = vmatmul.mubr.f32.gmra.mxu0 %v231
  %v590 = vpop.f32.mrf.mxu0
  %v591 = vadd.f32 0.0, %v590
  %v592 = vpop.f32.mrf.mxu0
  %593 = vmatprep.mubr.f32.mxu0 0.0
  %594 = vmatmul.mubr.f32.gmra.mxu0 %v234
  %v595 = vpop.f32.mrf.mxu0
  %v596 = vadd.f32 0.0, %v595
  %v597 = vpop.f32.mrf.mxu0
  %598 = vmatprep.mubr.f32.mxu0 0.0
  %599 = vmatmul.mubr.f32.gmra.mxu0 %v237
  %v600 = vpop.f32.mrf.mxu0
  %v601 = vadd.f32 0.0, %v600
  %v602 = vpop.f32.mrf.mxu0
  %603 = vmatprep.mubr.f32.mxu0 0.0
  %604 = vmatmul.mubr.f32.gmra.mxu0 %v240
  %v605 = vpop.f32.mrf.mxu0
  %v606 = vadd.f32 0.0, %v605
  %v607 = vpop.f32.mrf.mxu0
  %608 = vmatprep.mubr.f32.mxu0 0.0
  %609 = vmatmul.mubr.f32.gmra.mxu0 %v243
  %v610 = vpop.f32.mrf.mxu0
  %v611 = vadd.f32 0.0, %v610
  %v612 = vpop.f32.mrf.mxu0
  %613 = vmatprep.mubr.f32.mxu0 0.0
  %614 = vmatmul.mubr.f32.gmra.mxu0 %v246
  %v615 = vpop.f32.mrf.mxu0
  %v616 = vadd.f32 0.0, %v615
  %v617 = vpop.f32.mrf.mxu0
  %618 = vmatprep.mubr.f32.mxu0 0.0
  %619 = vmatmul.mubr.f32.gmra.mxu0 %v249
  %v620 = vpop.f32.mrf.mxu0
  %v621 = vadd.f32 0.0, %v620
  %v622 = vpop.f32.mrf.mxu0
  %623 = vmatprep.mubr.f32.mxu0 0.0
  %624 = vmatmul.mubr.f32.gmra.mxu0 %v252
  %v625 = vpop.f32.mrf.mxu0
  %v626 = vadd.f32 0.0, %v625
  %v627 = vpop.f32.mrf.mxu0
  %628 = vmatprep.mubr.f32.mxu0 0.0
  %629 = vmatmul.mubr.f32.gmra.mxu0 %v255
  %v630 = vpop.f32.mrf.mxu0
  %v631 = vadd.f32 0.0, %v630
  %v632 = vpop.f32.mrf.mxu0
  %633 = vmatprep.mubr.f32.mxu0 0.0
  %634 = vmatmul.mubr.f32.gmra.mxu0 %v258
  %v635 = vpop.f32.mrf.mxu0
  %v636 = vadd.f32 0.0, %v635
  %v637 = vpop.f32.mrf.mxu0
  %638 = vmatprep.mubr.f32.mxu0 0.0
  %639 = vmatmul.mubr.f32.gmra.mxu0 %v261
  %v640 = vpop.f32.mrf.mxu0
  %v641 = vadd.f32 0.0, %v640
  %v642 = vpop.f32.mrf.mxu0
  %643 = vmatprep.mubr.f32.mxu0 0.0
  %644 = vmatmul.mubr.f32.gmra.mxu0 %v264
  %v645 = vpop.f32.mrf.mxu0
  %v646 = vadd.f32 0.0, %v645
  %v647 = vpop.f32.mrf.mxu0
  %648 = vmatprep.mubr.f32.mxu0 0.0
  %649 = vmatmul.mubr.f32.gmra.mxu0 %v267
  %v650 = vpop.f32.mrf.mxu0
  %v651 = vadd.f32 0.0, %v650
  %v652 = vpop.f32.mrf.mxu0
  %653 = vmatprep.mubr.f32.mxu0 0.0
  %654 = vmatmul.mubr.f32.gmra.mxu0 %v270
  %v655 = vpop.f32.mrf.mxu0
  %v656 = vadd.f32 0.0, %v655
  %v657 = vpop.f32.mrf.mxu0
  %658 = vmatprep.mubr.f32.mxu0 0.0
  %659 = vmatmul.mubr.f32.gmra.mxu0 %v273
  %v660 = vpop.f32.mrf.mxu0
  %v661 = vadd.f32 0.0, %v660
  %v662 = vpop.f32.mrf.mxu0
  %663 = vdwg.mxu0
  %v664 = vld [vmem:[%s2] sm:$0x1]
  %v666 = vlaneseq
  %v667 = vshrl.u32 %v666, 7
  %v668 = vsub.s32 0, %v667
  %v669 = vrot.slane %v664, %v668
  %v671 = vmul.f32 %v346, %v669
  %v672 = vmul.f32 %v351, %v669
  %v673 = vmul.f32 %v356, %v669
  %v674 = vmul.f32 %v361, %v669
  %v675 = vmul.f32 %v366, %v669
  %v676 = vmul.f32 %v371, %v669
  %v677 = vmul.f32 %v376, %v669
  %v678 = vmul.f32 %v381, %v669
  %v679 = vmul.f32 %v386, %v669
  %v680 = vmul.f32 %v391, %v669
  %v681 = vmul.f32 %v396, %v669
  %v682 = vmul.f32 %v401, %v669
  %v683 = vmul.f32 %v406, %v669
  %v684 = vmul.f32 %v411, %v669
  %v685 = vmul.f32 %v416, %v669
  %v686 = vmul.f32 %v421, %v669
  %v687 = vmul.f32 %v426, %v669
  %v688 = vmul.f32 %v431, %v669
  %v689 = vmul.f32 %v436, %v669
  %v690 = vmul.f32 %v441, %v669
  %v691 = vmul.f32 %v446, %v669
  %v692 = vmul.f32 %v451, %v669
  %v693 = vmul.f32 %v456, %v669
  %v694 = vmul.f32 %v461, %v669
  %v695 = vmul.f32 %v466, %v669
  %v696 = vmul.f32 %v471, %v669
  %v697 = vmul.f32 %v476, %v669
  %v698 = vmul.f32 %v481, %v669
  %v699 = vmul.f32 %v486, %v669
  %v700 = vmul.f32 %v491, %v669
  %v701 = vmul.f32 %v496, %v669
  %v702 = vmul.f32 %v501, %v669
  %v703 = vmul.f32 %v506, %v669
  %v704 = vmul.f32 %v511, %v669
  %v705 = vmul.f32 %v516, %v669
  %v706 = vmul.f32 %v521, %v669
  %v707 = vmul.f32 %v526, %v669
  %v708 = vmul.f32 %v531, %v669
  %v709 = vmul.f32 %v536, %v669
  %v710 = vmul.f32 %v541, %v669
  %v711 = vmul.f32 %v546, %v669
  %v712 = vmul.f32 %v551, %v669
  %v713 = vmul.f32 %v556, %v669
  %v714 = vmul.f32 %v561, %v669
  %v715 = vmul.f32 %v566, %v669
  %v716 = vmul.f32 %v571, %v669
  %v717 = vmul.f32 %v576, %v669
  %v718 = vmul.f32 %v581, %v669
  %v719 = vmul.f32 %v586, %v669
  %v720 = vmul.f32 %v591, %v669
  %v721 = vmul.f32 %v596, %v669
  %v722 = vmul.f32 %v601, %v669
  %v723 = vmul.f32 %v606, %v669
  %v724 = vmul.f32 %v611, %v669
  %v725 = vmul.f32 %v616, %v669
  %v726 = vmul.f32 %v621, %v669
  %v727 = vmul.f32 %v626, %v669
  %v728 = vmul.f32 %v631, %v669
  %v729 = vmul.f32 %v636, %v669
  %v730 = vmul.f32 %v641, %v669
  %v731 = vmul.f32 %v646, %v669
  %v732 = vmul.f32 %v651, %v669
  %v733 = vmul.f32 %v656, %v669
  %v734 = vmul.f32 %v661, %v669
  %v735 = vld [vmem:[%s3] sm:$0x1]
  %v737 = vlaneseq
  %v738 = vshrl.u32 %v737, 7
  %v739 = vsub.s32 0, %v738
  %v740 = vrot.slane %v735, %v739
  %v742 = vadd.f32 %v671, %v740
  %v743 = vadd.f32 %v672, %v740
  %v744 = vadd.f32 %v673, %v740
  %v745 = vadd.f32 %v674, %v740
  %v746 = vadd.f32 %v675, %v740
  %v747 = vadd.f32 %v676, %v740
  %v748 = vadd.f32 %v677, %v740
  %v749 = vadd.f32 %v678, %v740
  %v750 = vadd.f32 %v679, %v740
  %v751 = vadd.f32 %v680, %v740
  %v752 = vadd.f32 %v681, %v740
  %v753 = vadd.f32 %v682, %v740
  %v754 = vadd.f32 %v683, %v740
  %v755 = vadd.f32 %v684, %v740
  %v756 = vadd.f32 %v685, %v740
  %v757 = vadd.f32 %v686, %v740
  %v758 = vadd.f32 %v687, %v740
  %v759 = vadd.f32 %v688, %v740
  %v760 = vadd.f32 %v689, %v740
  %v761 = vadd.f32 %v690, %v740
  %v762 = vadd.f32 %v691, %v740
  %v763 = vadd.f32 %v692, %v740
  %v764 = vadd.f32 %v693, %v740
  %v765 = vadd.f32 %v694, %v740
  %v766 = vadd.f32 %v695, %v740
  %v767 = vadd.f32 %v696, %v740
  %v768 = vadd.f32 %v697, %v740
  %v769 = vadd.f32 %v698, %v740
  %v770 = vadd.f32 %v699, %v740
  %v771 = vadd.f32 %v700, %v740
  %v772 = vadd.f32 %v701, %v740
  %v773 = vadd.f32 %v702, %v740
  %v774 = vadd.f32 %v703, %v740
  %v775 = vadd.f32 %v704, %v740
  %v776 = vadd.f32 %v705, %v740
  %v777 = vadd.f32 %v706, %v740
  %v778 = vadd.f32 %v707, %v740
  %v779 = vadd.f32 %v708, %v740
  %v780 = vadd.f32 %v709, %v740
  %v781 = vadd.f32 %v710, %v740
  %v782 = vadd.f32 %v711, %v740
  %v783 = vadd.f32 %v712, %v740
  %v784 = vadd.f32 %v713, %v740
  %v785 = vadd.f32 %v714, %v740
  %v786 = vadd.f32 %v715, %v740
  %v787 = vadd.f32 %v716, %v740
  %v788 = vadd.f32 %v717, %v740
  %v789 = vadd.f32 %v718, %v740
  %v790 = vadd.f32 %v719, %v740
  %v791 = vadd.f32 %v720, %v740
  %v792 = vadd.f32 %v721, %v740
  %v793 = vadd.f32 %v722, %v740
  %v794 = vadd.f32 %v723, %v740
  %v795 = vadd.f32 %v724, %v740
  %v796 = vadd.f32 %v725, %v740
  %v797 = vadd.f32 %v726, %v740
  %v798 = vadd.f32 %v727, %v740
  %v799 = vadd.f32 %v728, %v740
  %v800 = vadd.f32 %v729, %v740
  %v801 = vadd.f32 %v730, %v740
  %v802 = vadd.f32 %v731, %v740
  %v803 = vadd.f32 %v732, %v740
  %v804 = vadd.f32 %v733, %v740
  %v805 = vadd.f32 %v734, %v740
  %v806 = vmax.f32 %v742, 0.0
  %v807 = vmax.f32 %v743, 0.0
  %v808 = vmax.f32 %v744, 0.0
  %v809 = vmax.f32 %v745, 0.0
  %v810 = vmax.f32 %v746, 0.0
  %v811 = vmax.f32 %v747, 0.0
  %v812 = vmax.f32 %v748, 0.0
  %v813 = vmax.f32 %v749, 0.0
  %v814 = vmax.f32 %v750, 0.0
  %v815 = vmax.f32 %v751, 0.0
  %v816 = vmax.f32 %v752, 0.0
  %v817 = vmax.f32 %v753, 0.0
  %v818 = vmax.f32 %v754, 0.0
  %v819 = vmax.f32 %v755, 0.0
  %v820 = vmax.f32 %v756, 0.0
  %v821 = vmax.f32 %v757, 0.0
  %v822 = vmax.f32 %v758, 0.0
  %v823 = vmax.f32 %v759, 0.0
  %v824 = vmax.f32 %v760, 0.0
  %v825 = vmax.f32 %v761, 0.0
  %v826 = vmax.f32 %v762, 0.0
  %v827 = vmax.f32 %v763, 0.0
  %v828 = vmax.f32 %v764, 0.0
  %v829 = vmax.f32 %v765, 0.0
  %v830 = vmax.f32 %v766, 0.0
  %v831 = vmax.f32 %v767, 0.0
  %v832 = vmax.f32 %v768, 0.0
  %v833 = vmax.f32 %v769, 0.0
  %v834 = vmax.f32 %v770, 0.0
  %v835 = vmax.f32 %v771, 0.0
  %v836 = vmax.f32 %v772, 0.0
  %v837 = vmax.f32 %v773, 0.0
  %v838 = vmax.f32 %v774, 0.0
  %v839 = vmax.f32 %v775, 0.0
  %v840 = vmax.f32 %v776, 0.0
  %v841 = vmax.f32 %v777, 0.0
  %v842 = vmax.f32 %v778, 0.0
  %v843 = vmax.f32 %v779, 0.0
  %v844 = vmax.f32 %v780, 0.0
  %v845 = vmax.f32 %v781, 0.0
  %v846 = vmax.f32 %v782, 0.0
  %v847 = vmax.f32 %v783, 0.0
  %v848 = vmax.f32 %v784, 0.0
  %v849 = vmax.f32 %v785, 0.0
  %v850 = vmax.f32 %v786, 0.0
  %v851 = vmax.f32 %v787, 0.0
  %v852 = vmax.f32 %v788, 0.0
  %v853 = vmax.f32 %v789, 0.0
  %v854 = vmax.f32 %v790, 0.0
  %v855 = vmax.f32 %v791, 0.0
  %v856 = vmax.f32 %v792, 0.0
  %v857 = vmax.f32 %v793, 0.0
  %v858 = vmax.f32 %v794, 0.0
  %v859 = vmax.f32 %v795, 0.0
  %v860 = vmax.f32 %v796, 0.0
  %v861 = vmax.f32 %v797, 0.0
  %v862 = vmax.f32 %v798, 0.0
  %v863 = vmax.f32 %v799, 0.0
  %v864 = vmax.f32 %v800, 0.0
  %v865 = vmax.f32 %v801, 0.0
  %v866 = vmax.f32 %v802, 0.0
  %v867 = vmax.f32 %v803, 0.0
  %v868 = vmax.f32 %v804, 0.0
  %v869 = vmax.f32 %v805, 0.0
  %870 = vst.msk [vmem:[%s4] sm:$0xff] %vm82, %v806
  %871 = vst.msk [vmem:[%s4 + $0x8] sm:$0xff] %vm82, %v807
  %872 = vst.msk [vmem:[%s4 + $0x10] sm:$0xff] %vm82, %v808
  %873 = vst.msk [vmem:[%s4 + $0x18] sm:$0xff] %vm82, %v809
  %874 = vst.msk [vmem:[%s4 + $0x20] sm:$0xff] %vm82, %v810
  %875 = vst.msk [vmem:[%s4 + $0x28] sm:$0xff] %vm82, %v811
  %876 = vst.msk [vmem:[%s4 + $0x30] sm:$0xff] %vm82, %v812
  %877 = vst.msk [vmem:[%s4 + $0x38] sm:$0xff] %vm82, %v813
  %878 = vst.msk [vmem:[%s4 + $0x40] sm:$0xff] %vm82, %v814
  %879 = vst.msk [vmem:[%s4 + $0x48] sm:$0xff] %vm82, %v815
  %880 = vst.msk [vmem:[%s4 + $0x50] sm:$0xff] %vm82, %v816
  %881 = vst.msk [vmem:[%s4 + $0x58] sm:$0xff] %vm82, %v817
  %882 = vst.msk [vmem:[%s4 + $0x60] sm:$0xff] %vm82, %v818
  %883 = vst.msk [vmem:[%s4 + $0x68] sm:$0xff] %vm82, %v819
  %884 = vst.msk [vmem:[%s4 + $0x70] sm:$0xff] %vm82, %v820
  %885 = vst.msk [vmem:[%s4 + $0x78] sm:$0xff] %vm82, %v821
  %886 = vst.msk [vmem:[%s4 + $0x80] sm:$0xff] %vm82, %v822
  %887 = vst.msk [vmem:[%s4 + $0x88] sm:$0xff] %vm82, %v823
  %888 = vst.msk [vmem:[%s4 + $0x90] sm:$0xff] %vm82, %v824
  %889 = vst.msk [vmem:[%s4 + $0x98] sm:$0xff] %vm82, %v825
  %890 = vst.msk [vmem:[%s4 + $0xa0] sm:$0xff] %vm82, %v826
  %891 = vst.msk [vmem:[%s4 + $0xa8] sm:$0xff] %vm82, %v827
  %892 = vst.msk [vmem:[%s4 + $0xb0] sm:$0xff] %vm82, %v828
  %893 = vst.msk [vmem:[%s4 + $0xb8] sm:$0xff] %vm82, %v829
  %894 = vst.msk [vmem:[%s4 + $0xc0] sm:$0xff] %vm82, %v830
  %895 = vst.msk [vmem:[%s4 + $0xc8] sm:$0xff] %vm82, %v831
  %896 = vst.msk [vmem:[%s4 + $0xd0] sm:$0xff] %vm82, %v832
  %897 = vst.msk [vmem:[%s4 + $0xd8] sm:$0xff] %vm82, %v833
  %898 = vst.msk [vmem:[%s4 + $0xe0] sm:$0xff] %vm82, %v834
  %899 = vst.msk [vmem:[%s4 + $0xe8] sm:$0xff] %vm82, %v835
  %900 = vst.msk [vmem:[%s4 + $0xf0] sm:$0xff] %vm82, %v836
  %901 = vst.msk [vmem:[%s4 + $0xf8] sm:$0xff] %vm82, %v837
  %902 = vst.msk [vmem:[%s4 + $0x100] sm:$0xff] %vm82, %v838
  %903 = vst.msk [vmem:[%s4 + $0x108] sm:$0xff] %vm82, %v839
  %904 = vst.msk [vmem:[%s4 + $0x110] sm:$0xff] %vm82, %v840
  %905 = vst.msk [vmem:[%s4 + $0x118] sm:$0xff] %vm82, %v841
  %906 = vst.msk [vmem:[%s4 + $0x120] sm:$0xff] %vm82, %v842
  %907 = vst.msk [vmem:[%s4 + $0x128] sm:$0xff] %vm82, %v843
  %908 = vst.msk [vmem:[%s4 + $0x130] sm:$0xff] %vm82, %v844
  %909 = vst.msk [vmem:[%s4 + $0x138] sm:$0xff] %vm82, %v845
  %910 = vst.msk [vmem:[%s4 + $0x140] sm:$0xff] %vm82, %v846
  %911 = vst.msk [vmem:[%s4 + $0x148] sm:$0xff] %vm82, %v847
  %912 = vst.msk [vmem:[%s4 + $0x150] sm:$0xff] %vm82, %v848
  %913 = vst.msk [vmem:[%s4 + $0x158] sm:$0xff] %vm82, %v849
  %914 = vst.msk [vmem:[%s4 + $0x160] sm:$0xff] %vm82, %v850
  %915 = vst.msk [vmem:[%s4 + $0x168] sm:$0xff] %vm82, %v851
  %916 = vst.msk [vmem:[%s4 + $0x170] sm:$0xff] %vm82, %v852
  %917 = vst.msk [vmem:[%s4 + $0x178] sm:$0xff] %vm82, %v853
  %918 = vst.msk [vmem:[%s4 + $0x180] sm:$0xff] %vm82, %v854
  %919 = vst.msk [vmem:[%s4 + $0x188] sm:$0xff] %vm82, %v855
  %920 = vst.msk [vmem:[%s4 + $0x190] sm:$0xff] %vm82, %v856
  %921 = vst.msk [vmem:[%s4 + $0x198] sm:$0xff] %vm82, %v857
  %922 = vst.msk [vmem:[%s4 + $0x1a0] sm:$0xff] %vm82, %v858
  %923 = vst.msk [vmem:[%s4 + $0x1a8] sm:$0xff] %vm82, %v859
  %924 = vst.msk [vmem:[%s4 + $0x1b0] sm:$0xff] %vm82, %v860
  %925 = vst.msk [vmem:[%s4 + $0x1b8] sm:$0xff] %vm82, %v861
  %926 = vst.msk [vmem:[%s4 + $0x1c0] sm:$0xff] %vm82, %v862
  %927 = vst.msk [vmem:[%s4 + $0x1c8] sm:$0xff] %vm82, %v863
  %928 = vst.msk [vmem:[%s4 + $0x1d0] sm:$0xff] %vm82, %v864
  %929 = vst.msk [vmem:[%s4 + $0x1d8] sm:$0xff] %vm82, %v865
  %930 = vst.msk [vmem:[%s4 + $0x1e0] sm:$0xff] %vm82, %v866
  %931 = vst.msk [vmem:[%s4 + $0x1e8] sm:$0xff] %vm82, %v867
  %932 = vst.msk [vmem:[%s4 + $0x1f0] sm:$0xff] %vm82, %v868
  %933 = vst.msk [vmem:[%s4 + $0x1f8] sm:$0xff] %vm82, %v869
  // Predicated region
  $region18: #{tpu_custom_call.1} parent=0 // pred_check
    _
  $region19: #{tpu_custom_call.1} parent=0 // pred_check_branch
    %935 = sbr.rel (0) target = $region21
  $region20: #{tpu_custom_call.1} parent=0 // pred_region
    _
  $region21: #{tpu_custom_call.1} parent=0 // pred_fallthru
    _
  // Predicated region
  $region22: #{tpu_custom_call.1} parent=0 // pred_check
    _
  $region23: #{tpu_custom_call.1} parent=0 // pred_check_branch
    %937 = sbr.rel (0) target = $region25
  $region24: #{tpu_custom_call.1} parent=0 // pred_region
    _
  $region25: #{tpu_custom_call.1} parent=0 // pred_fallthru
    _

</llo_original>
